<compile_context>
chip_gen: v6e
topology: v6e:2x2x1
jax: 0.10.0
libtpu: 0.0.40
codegen_flags: <defaults>
</compile_context>

<pallas_src>
import functools

import jax
import jax.numpy as jnp
from jax.experimental import pallas as pl
from jax.experimental.pallas import tpu as pltpu

# Feature configuration (mirrors DeepCrossingModel.__init__)
EMB_DIMS = {
    "userid": 16,
    "device": 2,
    "authorid": 4,
    "bgm_song_id": 4,
    "bgm_singer_id": 4,
    "manual_tag_list": 4,
}
NUM_DENSE = 16
INPUT_DIM = NUM_DENSE + sum(EMB_DIMS.values())   # 50
RESIDUAL_INTERNAL_DIM = 128
RESIDUAL_NETWORK_NUM = 1

_MAX_BATCH_TILE = 4096   # rows per grid step (multiple of 16 for bf16 packing)
_ROW_ALIGN = 16          # bf16 sublane packing granularity


def _round_up(x, m):
    return ((x + m - 1) // m) * m


def deepcrossing_kernel(n_res, x_ref, *refs):
    """One batch tile of the DeepCrossing MLP.

    x_ref: (TB, 50) bf16
    per residual unit i: w1_i (50,128) bf16, b1_i (1,128) f32,
                         w2_i (128,50) bf16, b2_i (1,50)  f32
    wo_ref: (1, 50) f32    bo_ref: (1, 1) f32
    out_ref: (TB, 2) f32  -- column 0 = prob, column 1 = logit
    """
    unit_refs = refs[: 4 * n_res]
    wo_ref = refs[4 * n_res]
    bo_ref = refs[4 * n_res + 1]
    out_ref = refs[4 * n_res + 2]

    x_bf = x_ref[...]                             # (TB, 50) bf16, MXU-ready
    net = x_bf.astype(jnp.float32)                # residual carried in f32
    for i in range(n_res):                        # static unroll (n_res small)
        w1, b1, w2, b2 = unit_refs[4 * i: 4 * i + 4]
        lhs = x_bf if i == 0 else net.astype(jnp.bfloat16)
        h = jnp.dot(lhs, w1[...],
                    preferred_element_type=jnp.float32) + b1[...]
        h = jnp.maximum(h, 0.0)
        y = jnp.dot(h.astype(jnp.bfloat16), w2[...],
                    preferred_element_type=jnp.float32) + b2[...]
        net = jnp.maximum(net + y, 0.0)

    # 50 -> 1 output projection as VPU multiply + lane reduction (avoids an
    # MXU matmul that would use a single output column).
    logit = jnp.sum(net * wo_ref[...], axis=-1, keepdims=True) + bo_ref[...]
    prob = jax.nn.sigmoid(logit)

    # Single packed store of [prob, logit] (one masked vst per sublane group
    # instead of two).
    out_ref[...] = jnp.concatenate([prob, logit], axis=-1)


def deepcrossing_forward(dense, category, params):
    """Embedding gather + concat in JAX; batch-tiled MLP in the Pallas kernel."""
    # TODO(synk): fuse the embedding gather into the kernel (scalar-prefetched
    # indices + in-kernel gather) to remove the HBM round trip of `x`.
    cat_embs = [jnp.take(params["emb"][name], category[name], axis=0)
                for name in EMB_DIMS]
    x = jnp.concatenate([dense.astype(jnp.float32)] + cat_embs, axis=1)
    assert x.shape[1] == INPUT_DIM

    B = x.shape[0]
    n_res = RESIDUAL_NETWORK_NUM
    tb = min(_MAX_BATCH_TILE, _round_up(B, _ROW_ALIGN))
    padded_b = _round_up(B, tb)
    if padded_b != B:
        x = jnp.pad(x, ((0, padded_b - B), (0, 0)))
    # gather + concat + pad + convert fuse into one XLA fusion writing bf16.
    x_bf16 = x.astype(jnp.bfloat16)

    def _const_spec(shape):
        return pl.BlockSpec(shape, lambda i: (0,) * len(shape))

    operands = [x_bf16]
    in_specs = [pl.BlockSpec((tb, INPUT_DIM), lambda i: (i, 0))]

    for i in range(n_res):
        w1 = params["w1"][i].astype(jnp.bfloat16)   # (50, 128)
        b1 = params["b1"][i].astype(jnp.float32)    # (1, 128)
        w2 = params["w2"][i].astype(jnp.bfloat16)   # (128, 50)
        b2 = params["b2"][i].astype(jnp.float32)    # (1, 50)
        operands += [w1, b1, w2, b2]
        in_specs += [_const_spec(w1.shape), _const_spec(b1.shape),
                     _const_spec(w2.shape), _const_spec(b2.shape)]

    wo_row = params["wo"].reshape(1, INPUT_DIM).astype(jnp.float32)
    bo = params["bo"].reshape(1, 1).astype(jnp.float32)
    operands += [wo_row, bo]
    in_specs += [_const_spec(wo_row.shape), _const_spec(bo.shape)]

    flops = 2 * padded_b * (n_res * 2 * INPUT_DIM * RESIDUAL_INTERNAL_DIM
                            + INPUT_DIM)
    weight_bytes = sum(int(o.size) * o.dtype.itemsize for o in operands[1:])
    bytes_accessed = (padded_b * INPUT_DIM * 2      # bf16 x stream
                      + padded_b * 2 * 4            # f32 packed output
                      + weight_bytes)

    out = pl.pallas_call(
        functools.partial(deepcrossing_kernel, n_res),
        out_shape=jax.ShapeDtypeStruct((padded_b, 2), jnp.float32),
        grid=(padded_b // tb,),
        in_specs=in_specs,
        out_specs=pl.BlockSpec((tb, 2), lambda i: (i, 0)),
        compiler_params=pltpu.CompilerParams(
            dimension_semantics=("parallel",),
            vmem_limit_bytes=32 * 1024 * 1024),
        cost_estimate=pl.CostEstimate(
            flops=flops,
            transcendentals=padded_b,
            bytes_accessed=bytes_accessed),
    )(*operands)

    prob = out[:B, 0:1]
    logit = out[:B, 1:2]
    return prob, logit


def init_params(key, vocab_sizes):
    """Deterministic parameter init (uniform +-1/sqrt(fan_in), like nn.Linear)."""
    keys = jax.random.split(key, 16)
    ki = iter(keys)

    def uniform(k, shape, fan_in):
        bound = 1.0 / jnp.sqrt(jnp.float32(fan_in))
        return jax.random.uniform(k, shape, jnp.float32, -bound, bound)

    emb = {}
    for name, dim in EMB_DIMS.items():
        emb[name] = jax.random.normal(next(ki), (vocab_sizes[name], dim), jnp.float32)

    n = RESIDUAL_NETWORK_NUM
    params = {
        "emb": emb,
        "w1": uniform(next(ki), (n, INPUT_DIM, RESIDUAL_INTERNAL_DIM), INPUT_DIM),
        "b1": uniform(next(ki), (n, 1, RESIDUAL_INTERNAL_DIM), INPUT_DIM),
        "w2": uniform(next(ki), (n, RESIDUAL_INTERNAL_DIM, INPUT_DIM), RESIDUAL_INTERNAL_DIM),
        "b2": uniform(next(ki), (n, 1, INPUT_DIM), RESIDUAL_INTERNAL_DIM),
        "wo": uniform(next(ki), (INPUT_DIM, 1), INPUT_DIM),
        "bo": uniform(next(ki), (1, 1), INPUT_DIM),
    }
    return params


def reference_forward(dense, category, params):
    """Pure-JAX reference using the same bf16-MXU-input / f32-accumulate math."""
    cat_embs = [jnp.take(params["emb"][name], category[name], axis=0)
                for name in EMB_DIMS]
    net = jnp.concatenate([dense.astype(jnp.float32)] + cat_embs, axis=1)
    for i in range(RESIDUAL_NETWORK_NUM):
        w1 = params["w1"][i].astype(jnp.bfloat16)
        w2 = params["w2"][i].astype(jnp.bfloat16)
        h = jnp.dot(net.astype(jnp.bfloat16), w1,
                    preferred_element_type=jnp.float32) + params["b1"][i]
        h = jnp.maximum(h, 0.0)
        y = jnp.dot(h.astype(jnp.bfloat16), w2,
                    preferred_element_type=jnp.float32) + params["b2"][i]
        net = jnp.maximum(net + y, 0.0)
    logit = jnp.sum(net * params["wo"].reshape(1, -1), axis=-1,
                    keepdims=True) + params["bo"].reshape(1, 1)
    return jax.nn.sigmoid(logit), logit


if __name__ == "__main__":
    key = jax.random.PRNGKey(0)
    k_param, k_dense, *k_cat = jax.random.split(key, 2 + len(EMB_DIMS))

    B = 4
    # TODO(synk): vocab sizes in the original module come from vocab files; use
    # small synthetic vocabularies here.
    vocab_sizes = {name: 53 for name in EMB_DIMS}

    params = init_params(k_param, vocab_sizes)
    dense = jax.random.normal(k_dense, (B, NUM_DENSE), jnp.float32)
    category = {
        name: jax.random.randint(k, (B,), 0, vocab_sizes[name], jnp.int32)
        for name, k in zip(EMB_DIMS, k_cat)
    }

    prob, logit = deepcrossing_forward(dense, category, params)
    jax.block_until_ready((prob, logit))

    prob_ref, logit_ref = reference_forward(dense, category, params)
    assert prob.shape == (B, 1) and logit.shape == (B, 1)
    # bf16 MXU inputs -> compare against a reference that uses the same
    # bf16-input / f32-accumulate math; tolerance accounts for reduce-order.
    assert jnp.allclose(logit, logit_ref, atol=2e-3, rtol=2e-3)
    assert jnp.allclose(prob, prob_ref, atol=2e-3, rtol=2e-3)

    print("KERNEL_OK")
</pallas_src>

<mosaic_0001>
module attributes {stable_mosaic.version = 11 : i64} {
  func.func @deepcrossing_kernel(%arg0: i32, %arg1: memref<16x50xbf16, #tpu.memory_space<vmem>>, %arg2: memref<50x128xbf16, #tpu.memory_space<vmem>>, %arg3: memref<1x128xf32, #tpu.memory_space<vmem>>, %arg4: memref<128x50xbf16, #tpu.memory_space<vmem>>, %arg5: memref<1x50xf32, #tpu.memory_space<vmem>>, %arg6: memref<1x50xf32, #tpu.memory_space<vmem>>, %arg7: memref<1x1xf32, #tpu.memory_space<vmem>>, %arg8: memref<16x2xf32, #tpu.memory_space<vmem>>) attributes {dimension_semantics = [#tpu.dimension_semantics<parallel>], iteration_bounds = array<i64: 1>, scalar_prefetch = 0 : i64, scratch_operands = 0 : i64, tpu.core_type = #tpu.core_type<tc>, window_params = [{transform_indices = @transform_0, window_bounds = array<i64: 16, 50>}, {pipeline_mode = #tpu.pipeline_mode<synchronous>, transform_indices = @transform_1, window_bounds = array<i64: 50, 128>}, {pipeline_mode = #tpu.pipeline_mode<synchronous>, transform_indices = @transform_2, window_bounds = array<i64: 1, 128>}, {pipeline_mode = #tpu.pipeline_mode<synchronous>, transform_indices = @transform_3, window_bounds = array<i64: 128, 50>}, {pipeline_mode = #tpu.pipeline_mode<synchronous>, transform_indices = @transform_4, window_bounds = array<i64: 1, 50>}, {pipeline_mode = #tpu.pipeline_mode<synchronous>, transform_indices = @transform_5, window_bounds = array<i64: 1, 50>}, {pipeline_mode = #tpu.pipeline_mode<synchronous>, transform_indices = @transform_6, window_bounds = array<i64: 1, 1>}, {transform_indices = @transform_7, window_bounds = array<i64: 16, 2>}]} {
    %c0 = arith.constant 0 : index
    %c0_0 = arith.constant 0 : index
    %0 = vector.load %arg1[%c0, %c0_0] : memref<16x50xbf16, #tpu.memory_space<vmem>>, vector<16x50xbf16>
    %1 = arith.extf %0 : vector<16x50xbf16> to vector<16x50xf32>
    %c0_1 = arith.constant 0 : index
    %c0_2 = arith.constant 0 : index
    %2 = vector.load %arg2[%c0_1, %c0_2] : memref<50x128xbf16, #tpu.memory_space<vmem>>, vector<50x128xbf16>
    %cst = arith.constant dense<0.000000e+00> : vector<16x128xf32>
    %3 = tpu.matmul %0, %2, %cst {dimension_numbers = #tpu.dot_dimension_numbers<[1], [0], [0], [1], [0, 0, 1, 1], [], []>} : vector<16x50xbf16>, vector<50x128xbf16>, vector<16x128xf32> -> vector<16x128xf32>
    %c0_3 = arith.constant 0 : index
    %c0_4 = arith.constant 0 : index
    %4 = vector.load %arg3[%c0_3, %c0_4] : memref<1x128xf32, #tpu.memory_space<vmem>>, vector<1x128xf32>
    %5 = vector.broadcast %4 : vector<1x128xf32> to vector<16x128xf32>
    %6 = arith.addf %3, %5 : vector<16x128xf32>
    %cst_5 = arith.constant 0.000000e+00 : f32
    %7 = vector.broadcast %cst_5 : f32 to vector<16x128xf32>
    %8 = arith.maximumf %6, %7 : vector<16x128xf32>
    %9 = arith.truncf %8 : vector<16x128xf32> to vector<16x128xbf16>
    %c0_6 = arith.constant 0 : index
    %c0_7 = arith.constant 0 : index
    %10 = vector.load %arg4[%c0_6, %c0_7] : memref<128x50xbf16, #tpu.memory_space<vmem>>, vector<128x50xbf16>
    %cst_8 = arith.constant dense<0.000000e+00> : vector<16x50xf32>
    %11 = tpu.matmul %9, %10, %cst_8 {dimension_numbers = #tpu.dot_dimension_numbers<[1], [0], [0], [1], [0, 0, 1, 1], [], []>} : vector<16x128xbf16>, vector<128x50xbf16>, vector<16x50xf32> -> vector<16x50xf32>
    %c0_9 = arith.constant 0 : index
    %c0_10 = arith.constant 0 : index
    %12 = vector.load %arg5[%c0_9, %c0_10] : memref<1x50xf32, #tpu.memory_space<vmem>>, vector<1x50xf32>
    %13 = vector.broadcast %12 : vector<1x50xf32> to vector<16x50xf32>
    %14 = arith.addf %11, %13 : vector<16x50xf32>
    %15 = arith.addf %1, %14 : vector<16x50xf32>
    %cst_11 = arith.constant 0.000000e+00 : f32
    %16 = vector.broadcast %cst_11 : f32 to vector<16x50xf32>
    %17 = arith.maximumf %15, %16 : vector<16x50xf32>
    %c0_12 = arith.constant 0 : index
    %c0_13 = arith.constant 0 : index
    %18 = vector.load %arg6[%c0_12, %c0_13] : memref<1x50xf32, #tpu.memory_space<vmem>>, vector<1x50xf32>
    %19 = vector.broadcast %18 : vector<1x50xf32> to vector<16x50xf32>
    %20 = arith.mulf %17, %19 : vector<16x50xf32>
    %cst_14 = arith.constant dense<0.000000e+00> : vector<16xf32>
    %21 = vector.multi_reduction <add>, %20, %cst_14 [1] : vector<16x50xf32> to vector<16xf32>
    %22 = vector.shape_cast %21 : vector<16xf32> to vector<16x1xf32>
    %c0_15 = arith.constant 0 : index
    %c0_16 = arith.constant 0 : index
    %23 = vector.load %arg7[%c0_15, %c0_16] : memref<1x1xf32, #tpu.memory_space<vmem>>, vector<1x1xf32>
    %24 = vector.broadcast %23 : vector<1x1xf32> to vector<16x1xf32>
    %25 = arith.addf %22, %24 : vector<16x1xf32>
    %26 = arith.negf %25 : vector<16x1xf32>
    %27 = math.exp %26 : vector<16x1xf32>
    %cst_17 = arith.constant 1.000000e+00 : f32
    %28 = vector.broadcast %cst_17 : f32 to vector<16x1xf32>
    %29 = arith.addf %28, %27 : vector<16x1xf32>
    %30 = arith.divf %28, %29 : vector<16x1xf32>
    %31 = tpu.concatenate %30, %25 in 1 : vector<16x1xf32>, vector<16x1xf32> -> vector<16x2xf32>
    %c0_18 = arith.constant 0 : index
    %c0_19 = arith.constant 0 : index
    %32 = vector.load %arg8[%c0_18, %c0_19] : memref<16x2xf32, #tpu.memory_space<vmem>>, vector<16x2xf32>
    tpu.vector_store %arg8[%c0_18, %c0_19], %31 {strides = array<i32>} : memref<16x2xf32, #tpu.memory_space<vmem>>, vector<16x2xf32>,
    return
  }
  func.func @transform_0(%arg0: i32) -> (i32, i32) {
    %c0_i32 = arith.constant 0 : i32
    %c0_i32_0 = arith.constant 0 : i32
    return %arg0, %c0_i32 : i32, i32
  }
  func.func @transform_1(%arg0: i32) -> (i32, i32) {
    %c0_i32 = arith.constant 0 : i32
    %c0_i32_0 = arith.constant 0 : i32
    %c0_i32_1 = arith.constant 0 : i32
    return %c0_i32, %c0_i32_0 : i32, i32
  }
  func.func @transform_2(%arg0: i32) -> (i32, i32) {
    %c0_i32 = arith.constant 0 : i32
    %c0_i32_0 = arith.constant 0 : i32
    %c0_i32_1 = arith.constant 0 : i32
    return %c0_i32, %c0_i32_0 : i32, i32
  }
  func.func @transform_3(%arg0: i32) -> (i32, i32) {
    %c0_i32 = arith.constant 0 : i32
    %c0_i32_0 = arith.constant 0 : i32
    %c0_i32_1 = arith.constant 0 : i32
    return %c0_i32, %c0_i32_0 : i32, i32
  }
  func.func @transform_4(%arg0: i32) -> (i32, i32) {
    %c0_i32 = arith.constant 0 : i32
    %c0_i32_0 = arith.constant 0 : i32
    %c0_i32_1 = arith.constant 0 : i32
    return %c0_i32, %c0_i32_0 : i32, i32
  }
  func.func @transform_5(%arg0: i32) -> (i32, i32) {
    %c0_i32 = arith.constant 0 : i32
    %c0_i32_0 = arith.constant 0 : i32
    %c0_i32_1 = arith.constant 0 : i32
    return %c0_i32, %c0_i32_0 : i32, i32
  }
  func.func @transform_6(%arg0: i32) -> (i32, i32) {
    %c0_i32 = arith.constant 0 : i32
    %c0_i32_0 = arith.constant 0 : i32
    %c0_i32_1 = arith.constant 0 : i32
    return %c0_i32, %c0_i32_0 : i32, i32
  }
  func.func @transform_7(%arg0: i32) -> (i32, i32) {
    %c0_i32 = arith.constant 0 : i32
    %c0_i32_0 = arith.constant 0 : i32
    return %arg0, %c0_i32 : i32, i32
  }
}

</mosaic_0001>

<llo_original>
// kernel: tpu_custom_call.1
$region0: #{tpu_custom_call.1}
  #allocation0 [shape = 'u32[]', space=smem, size = 0x4, offset = 0x4, fixed_abs, tag = 'smem constant byte address 0x4 - core index']
  #allocation1 [shape = 'u32[144,128]{1,0:T(1,128)}', space=vmem, size = 0x12000, scoped, tag = 'internal scratch']
  #allocation2 [shape = 'f32[1,1]{1,0:T(1,128)S(1)}', space=vmem, size = 0x200, scoped, tag = 'scoped memory for tpu_custom_call.1']
  %s0 = inlined_call_operand.vmem [shape: bf16[16,50], index: 0, kind: input, shape index: {}]
  %s1 = inlined_call_operand.vmem [shape: bf16[50,128], index: 1, kind: input, shape index: {}]
  %s2 = inlined_call_operand.vmem [shape: f32[1,128], index: 2, kind: input, shape index: {}]
  %s3 = inlined_call_operand.vmem [shape: bf16[128,50], index: 3, kind: input, shape index: {}]
  %s4 = inlined_call_operand.vmem [shape: f32[1,50], index: 4, kind: input, shape index: {}]
  %s5 = inlined_call_operand.vmem [shape: f32[1,50], index: 5, kind: input, shape index: {}]
  %s6 = inlined_call_operand.<no memory space> [shape: f32[1,1], index: 6, kind: input, shape index: {}]
  %s7 = inlined_call_operand.vmem [shape: f32[16,2], index: 7, kind: output, shape index: {}]
  %s8 = sld [smem:[#allocation0]]
  $region38: #{tpu_custom_call.1} parent=0
    _
  %s10 = ssub.s32 1, %s8
  %s11 = scalar_select 0, %s10, %s8
  %v12 = vstv %s6
  %13 = vst [vmem:[#allocation2] sm:$0x1] %v12
  // Predicated region
  $region2: #{tpu_custom_call.1} parent=0 // pred_check
    _
  $region3: #{tpu_custom_call.1} parent=0 // pred_check_branch
    %15 = sbr.rel (0) target = $region5
  $region4: #{tpu_custom_call.1} parent=0 // pred_region
    _
  $region5: #{tpu_custom_call.1} parent=0 // pred_fallthru
    _
  // Predicated region
  $region6: #{tpu_custom_call.1} parent=0 // pred_check
    _
  $region7: #{tpu_custom_call.1} parent=0 // pred_check_branch
    %17 = sbr.rel (0) target = $region9
  $region8: #{tpu_custom_call.1} parent=0 // pred_region
    _
  $region9: #{tpu_custom_call.1} parent=0 // pred_fallthru
    _
  // Predicated region
  $region10: #{tpu_custom_call.1} parent=0 // pred_check
    _
  $region11: #{tpu_custom_call.1} parent=0 // pred_check_branch
    %19 = sbr.rel (0) target = $region13
  $region12: #{tpu_custom_call.1} parent=0 // pred_region
    _
  $region13: #{tpu_custom_call.1} parent=0 // pred_fallthru
    _
  // Predicated region
  $region14: #{tpu_custom_call.1} parent=0 // pred_check
    _
  $region15: #{tpu_custom_call.1} parent=0 // pred_check_branch
    %21 = sbr.rel (0) target = $region17
  $region16: #{tpu_custom_call.1} parent=0 // pred_region
    _
  $region17: #{tpu_custom_call.1} parent=0 // pred_fallthru
    _
  // Predicated region
  $region18: #{tpu_custom_call.1} parent=0 // pred_check
    _
  $region19: #{tpu_custom_call.1} parent=0 // pred_check_branch
    %23 = sbr.rel (0) target = $region21
  $region20: #{tpu_custom_call.1} parent=0 // pred_region
    _
  $region21: #{tpu_custom_call.1} parent=0 // pred_fallthru
    _
  // Predicated region
  $region22: #{tpu_custom_call.1} parent=0 // pred_check
    _
  $region23: #{tpu_custom_call.1} parent=0 // pred_check_branch
    %25 = sbr.rel (0) target = $region25
  $region24: #{tpu_custom_call.1} parent=0 // pred_region
    _
  $region25: #{tpu_custom_call.1} parent=0 // pred_fallthru
    _
  // Predicated region
  $region26: #{tpu_custom_call.1} parent=0 // pred_check
    _
  $region27: #{tpu_custom_call.1} parent=0 // pred_check_branch
    %27 = sbr.rel (0) target = $region29
  $region28: #{tpu_custom_call.1} parent=0 // pred_region
    _
  $region29: #{tpu_custom_call.1} parent=0 // pred_fallthru
    _
  %v29 = vld [vmem:[%s0] sm:$0xf]
  %v30 = vld [vmem:[%s0 + $0x4] sm:$0xf]
  %v31 = vunpack.c.l.bf16 %v29
  %v32 = vunpack.c.l.bf16 %v30
  %v33 = vld [vmem:[%s1] sm:$0xf]
  %v34 = vld [vmem:[%s1 + $0x4] sm:$0xf]
  %v35 = vld [vmem:[%s1 + $0x8] sm:$0xf]
  %v36 = vld [vmem:[%s1 + $0xc] sm:$0xf]
  %v37 = vld [vmem:[%s1 + $0x10] sm:$0xf]
  %v38 = vld [vmem:[%s1 + $0x14] sm:$0xf]
  %v39 = vld [vmem:[%s1 + $0x18] sm:$0x1]
  %v40 = vld [vmem:[%s2] sm:$0x1]
  %v42 = vlaneseq
  %v43 = vshrl.u32 %v42, 7
  %v44 = vsub.s32 0, %v43
  %v45 = vrot.slane %v40, %v44
  %v49 = vunpack.c.l.b16 %v29
  %v50 = vunpack.c.l.b16 %v30
  %v51 = vpack.c.b16 %v50, %v49
  %v59 = vunpack.c.l.b16 %v33
  %v60 = vunpack.c.l.b16 %v34
  %v61 = vunpack.c.l.b16 %v35
  %v62 = vunpack.c.l.b16 %v36
  %v63 = vunpack.c.l.b16 %v37
  %v64 = vunpack.c.l.b16 %v38
  %v65 = vunpack.c.l.b16 %v39
  %v66 = vpack.c.b16 %v60, %v59
  %v67 = vpack.c.b16 %v62, %v61
  %v68 = vpack.c.b16 %v64, %v63
  %v69 = vpack.c.b16 %v65, %v65
  %vm73 = vcmask 408576
  %v75 = vsel %vm73, %v51, 0
  %vm77 = vcmask 1040384
  %v79 = vsel %vm77, %v69, 0
  %81 = vmatprep.subr.bf16.mxu0 0
  %82 = vmatpush1.bf16.msra.mxu0 0
  %83 = vmatprep.subr.bf16.mxu0 0
  %84 = vmatpush1.bf16.msra.mxu0 0
  %85 = vmatprep.subr.bf16.mxu0 0
  %86 = vmatpush1.bf16.msra.mxu0 0
  %87 = vmatprep.subr.bf16.mxu0 0
  %88 = vmatpush1.bf16.msra.mxu0 0
  %89 = vmatprep.subr.bf16.mxu0 0
  %90 = vmatpush1.bf16.msra.mxu0 %v79
  %91 = vmatprep.subr.bf16.mxu0 0
  %92 = vmatpush1.bf16.msra.mxu0 %v68
  %93 = vmatprep.subr.bf16.mxu0 0
  %94 = vmatpush1.bf16.msra.mxu0 %v67
  %95 = vmatprep.subr.bf16.mxu0 0
  %96 = vmatpush1.bf16.msra.mxu0 %v66
  %97 = vmatprep.subr.bf16.mxu0 0
  %98 = vmatpush2.bf16.msra.mxu0 0
  %99 = vmatprep.subr.bf16.mxu0 0
  %100 = vmatpush2.bf16.msra.mxu0 0
  %101 = vmatprep.subr.bf16.mxu0 0
  %102 = vmatpush2.bf16.msra.mxu0 0
  %103 = vmatprep.subr.bf16.mxu0 0
  %104 = vmatpush2.bf16.msra.mxu0 0
  %105 = vmatprep.subr.bf16.mxu0 0
  %106 = vmatpush2.bf16.msra.mxu0 0
  %107 = vmatprep.subr.bf16.mxu0 0
  %108 = vmatpush2.bf16.msra.mxu0 0
  %109 = vmatprep.subr.bf16.mxu0 0
  %110 = vmatpush2.bf16.msra.mxu0 0
  %111 = vmatprep.subr.bf16.mxu0 0
  %112 = vmatpush2.bf16.msra.mxu0 0
  %113 = vmatprep.mubr.bf16.mxu0 0
  %114 = vmatmul.mubr.bf16.gmra.mxu0 %v75
  %v115 = vpop.f32.mrf.mxu0
  %v116 = vadd.f32 %v45, %v115
  %v117 = vpop.f32.mrf.mxu0
  %v118 = vpop.f32.mrf.mxu0
  %v119 = vadd.f32 %v45, %v118
  %v120 = vpop.f32.mrf.mxu0
  %121 = vdwg.mxu0
  %v122 = vmax.f32 %v116, 0.0
  %v123 = vmax.f32 %v119, 0.0
  %v124 = vpack.c.bf16 %v123, %v122
  %v125 = vld [vmem:[%s3] sm:$0xf]
  %v126 = vld [vmem:[%s3 + $0x4] sm:$0xf]
  %v127 = vld [vmem:[%s3 + $0x8] sm:$0xf]
  %v128 = vld [vmem:[%s3 + $0xc] sm:$0xf]
  %v129 = vld [vmem:[%s3 + $0x10] sm:$0xf]
  %v130 = vld [vmem:[%s3 + $0x14] sm:$0xf]
  %v131 = vld [vmem:[%s3 + $0x18] sm:$0xf]
  %v132 = vld [vmem:[%s3 + $0x1c] sm:$0xf]
  %v133 = vld [vmem:[%s3 + $0x20] sm:$0xf]
  %v134 = vld [vmem:[%s3 + $0x24] sm:$0xf]
  %v135 = vld [vmem:[%s3 + $0x28] sm:$0xf]
  %v136 = vld [vmem:[%s3 + $0x2c] sm:$0xf]
  %v137 = vld [vmem:[%s3 + $0x30] sm:$0xf]
  %v138 = vld [vmem:[%s3 + $0x34] sm:$0xf]
  %v139 = vld [vmem:[%s3 + $0x38] sm:$0xf]
  %v140 = vld [vmem:[%s3 + $0x3c] sm:$0xf]
  %v141 = vld [vmem:[%s4] sm:$0x1]
  %v143 = vlaneseq
  %v144 = vshrl.u32 %v143, 7
  %v145 = vsub.s32 0, %v144
  %v146 = vrot.slane %v141, %v145
  %v164 = vunpack.c.l.b16 %v125
  %v165 = vunpack.c.l.b16 %v126
  %v166 = vunpack.c.l.b16 %v127
  %v167 = vunpack.c.l.b16 %v128
  %v168 = vunpack.c.l.b16 %v129
  %v169 = vunpack.c.l.b16 %v130
  %v170 = vunpack.c.l.b16 %v131
  %v171 = vunpack.c.l.b16 %v132
  %v172 = vunpack.c.l.b16 %v133
  %v173 = vunpack.c.l.b16 %v134
  %v174 = vunpack.c.l.b16 %v135
  %v175 = vunpack.c.l.b16 %v136
  %v176 = vunpack.c.l.b16 %v137
  %v177 = vunpack.c.l.b16 %v138
  %v178 = vunpack.c.l.b16 %v139
  %v179 = vunpack.c.l.b16 %v140
  %v180 = vpack.c.b16 %v165, %v164
  %v181 = vpack.c.b16 %v167, %v166
  %v182 = vpack.c.b16 %v169, %v168
  %v183 = vpack.c.b16 %v171, %v170
  %v184 = vpack.c.b16 %v173, %v172
  %v185 = vpack.c.b16 %v175, %v174
  %v186 = vpack.c.b16 %v177, %v176
  %v187 = vpack.c.b16 %v179, %v178
  %196 = vmatprep.subr.bf16.mxu0 0
  %197 = vmatpush1.bf16.msra.mxu0 %v187
  %198 = vmatprep.subr.bf16.mxu0 0
  %199 = vmatpush1.bf16.msra.mxu0 %v186
  %200 = vmatprep.subr.bf16.mxu0 0
  %201 = vmatpush1.bf16.msra.mxu0 %v185
  %202 = vmatprep.subr.bf16.mxu0 0
  %203 = vmatpush1.bf16.msra.mxu0 %v184
  %204 = vmatprep.subr.bf16.mxu0 0
  %205 = vmatpush1.bf16.msra.mxu0 %v183
  %206 = vmatprep.subr.bf16.mxu0 0
  %207 = vmatpush1.bf16.msra.mxu0 %v182
  %208 = vmatprep.subr.bf16.mxu0 0
  %209 = vmatpush1.bf16.msra.mxu0 %v181
  %210 = vmatprep.subr.bf16.mxu0 0
  %211 = vmatpush1.bf16.msra.mxu0 %v180
  %212 = vmatprep.subr.bf16.mxu0 0
  %213 = vmatpush2.bf16.msra.mxu0 0
  %214 = vmatprep.subr.bf16.mxu0 0
  %215 = vmatpush2.bf16.msra.mxu0 0
  %216 = vmatprep.subr.bf16.mxu0 0
  %217 = vmatpush2.bf16.msra.mxu0 0
  %218 = vmatprep.subr.bf16.mxu0 0
  %219 = vmatpush2.bf16.msra.mxu0 0
  %220 = vmatprep.subr.bf16.mxu0 0
  %221 = vmatpush2.bf16.msra.mxu0 0
  %222 = vmatprep.subr.bf16.mxu0 0
  %223 = vmatpush2.bf16.msra.mxu0 0
  %224 = vmatprep.subr.bf16.mxu0 0
  %225 = vmatpush2.bf16.msra.mxu0 0
  %226 = vmatprep.subr.bf16.mxu0 0
  %227 = vmatpush2.bf16.msra.mxu0 0
  %228 = vmatprep.mubr.bf16.mxu0 0
  %229 = vmatmul.mubr.bf16.gmra.mxu0 %v124
  %v230 = vpop.f32.mrf.mxu0
  %v231 = vadd.f32 %v146, %v230
  %v232 = vpop.f32.mrf.mxu0
  %v233 = vpop.f32.mrf.mxu0
  %v234 = vadd.f32 %v146, %v233
  %v235 = vpop.f32.mrf.mxu0
  %236 = vdwg.mxu0
  %v237 = vadd.f32 %v31, %v231
  %v238 = vadd.f32 %v32, %v234
  %v239 = vmax.f32 %v237, 0.0
  %v240 = vmax.f32 %v238, 0.0
  %v241 = vld [vmem:[%s5] sm:$0x1]
  %v243 = vlaneseq
  %v244 = vshrl.u32 %v243, 7
  %v245 = vsub.s32 0, %v244
  %v246 = vrot.slane %v241, %v245
  %v248 = vmul.f32 %v239, %v246
  %v249 = vmul.f32 %v240, %v246
  %v250 = vsel %vm73, %v248, 0.0
  %251 = vadd.xlane.f32.xlu0 %v250
  %v252 = vpop.xlane.xlu0 %251
  %v253 = vsel %vm73, %v249, 0.0
  %254 = vadd.xlane.f32.xlu0 %v253
  %v255 = vpop.xlane.xlu0 %254
  %v256 = vld [vmem:[#allocation2] sm:$0x1]
  %v258 = vlaneseq
  %v259 = vshrl.u32 %v258, 7
  %v260 = vsub.s32 0, %v259
  %v261 = vrot.slane %v256, %v260
  %v263 = vadd.f32 %v252, %v261
  %v264 = vadd.f32 %v255, %v261
  %v265 = vxor.u32 %v263, 2147483648
  %v266 = vxor.u32 %v264, 2147483648
  %v267 = vmul.f32 %v265, 1.442695
  %v268 = vpow.pop %v267
  %v269 = vmul.f32 %v266, 1.442695
  %v270 = vpow.pop %v269
  %v271 = vadd.f32 %v268, 1.0
  %v272 = vadd.f32 %v270, 1.0
  %v273 = vrcp.pop %v271
  %v274 = vmul.f32 1.0, %v273
  %v275 = vrcp.pop %v272
  %v276 = vmul.f32 1.0, %v275
  %279 = vrot.lane.b32.xlu0 %v263, 1
  %v280 = vpop.permute.xlu0 %279
  %281 = vrot.lane.b32.xlu0 %v264, 1
  %v282 = vpop.permute.xlu0 %281
  %vm285 = vcmask 7168
  %v286 = vsel %vm285, %v274, %v280
  %v287 = vsel %vm285, %v276, %v282
  %vm288 = vcmask 15360
  %289 = vst.msk [vmem:[%s7] sm:$0xff] %vm288, %v286
  %290 = vst.msk [vmem:[%s7 + $0x8] sm:$0xff] %vm288, %v287
  // Predicated region
  $region30: #{tpu_custom_call.1} parent=0 // pred_check
    _
  $region31: #{tpu_custom_call.1} parent=0 // pred_check_branch
    %292 = sbr.rel (0) target = $region33
  $region32: #{tpu_custom_call.1} parent=0 // pred_region
    _
  $region33: #{tpu_custom_call.1} parent=0 // pred_fallthru
    _
  // Predicated region
  $region34: #{tpu_custom_call.1} parent=0 // pred_check
    _
  $region35: #{tpu_custom_call.1} parent=0 // pred_check_branch
    %294 = sbr.rel (0) target = $region37
  $region36: #{tpu_custom_call.1} parent=0 // pred_region
    _
  $region37: #{tpu_custom_call.1} parent=0 // pred_fallthru
    _

</llo_original>
